<compile_context>
chip_gen: v5e
topology: v5e:2x2
jax: 0.10.0
libtpu: 0.0.40
codegen_flags: <defaults>
</compile_context>

<pallas_src>
import functools

import jax
import jax.numpy as jnp
from jax.experimental import pallas as pl
from jax.experimental.pallas import tpu as pltpu

OUT_FEATURES = 2          # fc2 output width, fixed by the module (nn.Linear(hidden, 2))
O_PAD = 8                 # fc2 output zero-padded to 8 lanes (narrow HBM writeback)
TB = 8192                 # batch tile for the large-batch tiled path

# Conservative working-set budget for the grid-free (no-grid) path.  The
# smallest default scoped-VMEM limit is v5e's 16 MiB, so staying under ~12 MiB
# keeps the grid-free path safe on every generation without touching
# vmem_limit_bytes.
_GRID_FREE_VMEM_BUDGET = 12 * 1024 * 1024


def _mlp_kernel(x_ref, w1_ref, b1_ref, w2_ref, b2_ref, o_ref):
    """x:[B,F]  w1:[F,H]  b1:[1,H]  w2:[H,O_PAD]  b2:[1,O_PAD] -> o:[B,O_PAD].

    Weights arrive pre-transposed to [in, out], so both matmuls contract the
    LHS minor dim with the RHS major dim (canonical MXU layout, no in-kernel
    transpose of the resident weights).
    """
    h = jnp.dot(x_ref[...], w1_ref[...], preferred_element_type=jnp.float32)
    h = jnp.maximum(h + b1_ref[...], 0.0)                                # af = ReLU
    o = jnp.dot(h, w2_ref[...], preferred_element_type=jnp.float32)
    o_ref[...] = jnp.maximum(o + b2_ref[...], 0.0).astype(o_ref.dtype)   # af = ReLU


def prepare_params(w1, b1, w2, b2, o_pad=O_PAD):
    """One-time parameter prep (do this at init, NOT per forward call).

    * Transposes PyTorch [out, in] weights to [in, out] so the kernel's
      matmuls are canonical.
    * Makes biases 2-D.
    * Zero-pads fc2's output dim (2 -> o_pad) so padded output columns are
      exactly 0 before ReLU and can be sliced off exactly in the wrapper.
    """
    out_features, hidden = w2.shape
    w1t = jnp.asarray(w1).T                                   # (F, H)
    b1r = jnp.asarray(b1).reshape(1, hidden)                  # (1, H)
    w2t = jnp.zeros((hidden, o_pad), w2.dtype).at[:, :out_features].set(
        jnp.asarray(w2).T)                                    # (H, O_PAD)
    b2r = jnp.zeros((1, o_pad), b2.dtype).at[0, :out_features].set(
        jnp.asarray(b2))                                      # (1, O_PAD)
    return w1t, b1r, w2t, b2r, out_features


def _forward_single(x, w1t, b1r, w2t, b2r):
    """Grid-free call: whole arrays live in VMEM, no pipeline scaffolding."""
    B = x.shape[0]
    vmem = pl.BlockSpec(memory_space=pltpu.MemorySpace.VMEM)
    return pl.pallas_call(
        _mlp_kernel,
        out_shape=jax.ShapeDtypeStruct((B, w2t.shape[1]), x.dtype),
        in_specs=[vmem, vmem, vmem, vmem, vmem],
        out_specs=vmem,
    )(x, w1t, b1r, w2t, b2r)


def _forward_tiled(x, w1t, b1r, w2t, b2r, tb):
    """Batch-tiled call for large B: weights/biases stay resident in VMEM
    across grid steps; batch axis is 'parallel' (shards across v7x's 2 TCs,
    no-op on v5e/v6e).  vmem_limit left at the compiler default: the real
    footprint (double-buffered (TB,F) in + (TB,8) out + tiny weights) is only
    a few MiB."""
    B, F = x.shape
    H = w1t.shape[1]
    OP = w2t.shape[1]
    return pl.pallas_call(
        _mlp_kernel,
        out_shape=jax.ShapeDtypeStruct((B, OP), x.dtype),
        grid_spec=pltpu.PrefetchScalarGridSpec(
            num_scalar_prefetch=0,
            grid=(B // tb,),
            in_specs=[
                pl.BlockSpec((tb, F), lambda i: (i, 0)),   # x: tiled on batch
                pl.BlockSpec((F, H), lambda i: (0, 0)),    # w1t: resident
                pl.BlockSpec((1, H), lambda i: (0, 0)),    # b1: resident
                pl.BlockSpec((H, OP), lambda i: (0, 0)),   # w2t: resident
                pl.BlockSpec((1, OP), lambda i: (0, 0)),   # b2: resident
            ],
            out_specs=pl.BlockSpec((tb, OP), lambda i: (i, 0)),
        ),
        compiler_params=pltpu.CompilerParams(
            dimension_semantics=("parallel",),
        ),
    )(x, w1t, b1r, w2t, b2r)


def _fits_grid_free(batch, in_features, hidden, o_pad, x_itemsize):
    """Rough per-row working-set estimate for the grid-free path."""
    row_bytes = (in_features * x_itemsize   # x
                 + 2 * hidden * 4           # hidden activations (f32 temporaries)
                 + 2 * o_pad * 4)           # fc2 output + padded store
    return batch * row_bytes <= _GRID_FREE_VMEM_BUDGET


@functools.partial(jax.jit, static_argnames=("out_features",))
def net_forward(x, w1t, b1r, w2t, b2r, out_features=OUT_FEATURES):
    """Forward pass.  Expects params already run through prepare_params."""
    B, F = x.shape
    H = w1t.shape[1]
    OP = w2t.shape[1]

    if _fits_grid_free(B, F, H, OP, x.dtype.itemsize):
        # Small / mid batch: single grid-free invocation, no pads, no pipeline.
        out = _forward_single(x, w1t, b1r, w2t, b2r)
    else:
        # Large batch: pad B up to a multiple of TB and tile the batch axis
        # (crossover guarantees at least 2 grid steps here).
        bp = ((B + TB - 1) // TB) * TB
        xp = jnp.pad(x, ((0, bp - B), (0, 0))) if bp != B else x
        out = _forward_tiled(xp, w1t, b1r, w2t, b2r, TB)

    return out[:B, :out_features]


def _reference(x, w1, b1, w2, b2):
    h = jnp.maximum(x @ w1.T + b1, 0.0)
    return jnp.maximum(h @ w2.T + b2, 0.0)


if __name__ == "__main__":
    # Shapes consistent with the module: input_size=16, hidden_size=32,
    # output=2 (hard-coded fc2 out), batch=8; activation = ReLU.
    batch, input_size, hidden_size, out_size = 8, 16, 32, 2

    key = jax.random.PRNGKey(0)
    kx, k1, kb1, k2, kb2, kxl = jax.random.split(key, 6)

    x = jax.random.normal(kx, (batch, input_size), dtype=jnp.float32)

    # PyTorch-style init: U(-1/sqrt(fan_in), 1/sqrt(fan_in)).
    lim1 = 1.0 / (input_size ** 0.5)
    w1 = jax.random.uniform(k1, (hidden_size, input_size), jnp.float32, -lim1, lim1)
    b1 = jax.random.uniform(kb1, (hidden_size,), jnp.float32, -lim1, lim1)

    lim2 = 1.0 / (hidden_size ** 0.5)
    w2 = jax.random.uniform(k2, (out_size, hidden_size), jnp.float32, -lim2, lim2)
    b2 = jax.random.uniform(kb2, (out_size,), jnp.float32, -lim2, lim2)

    # One-time parameter prep (transpose + lane padding), outside the hot path.
    w1t, b1r, w2t, b2r, out_features = prepare_params(w1, b1, w2, b2)

    # Primary check: small batch -> grid-free path.
    out = net_forward(x, w1t, b1r, w2t, b2r, out_features=out_features)
    out = jax.block_until_ready(out)
    ref = _reference(x, w1, b1, w2, b2)
    assert out.shape == (batch, out_size)
    assert jnp.allclose(out, ref, atol=1e-5, rtol=1e-5), "small-batch mismatch"

    # Secondary check: large batch -> tiled path (exercises batch padding,
    # resident weights, narrow (TB, 8) output, and the [:B, :2] slice).
    big_batch = 40000  # above the grid-free VMEM crossover, not a multiple of TB
    x_big = jax.random.normal(kxl, (big_batch, input_size), dtype=jnp.float32)
    out_big = net_forward(x_big, w1t, b1r, w2t, b2r, out_features=out_features)
    out_big = jax.block_until_ready(out_big)
    ref_big = _reference(x_big, w1, b1, w2, b2)
    assert out_big.shape == (big_batch, out_size)
    assert jnp.allclose(out_big, ref_big, atol=1e-5, rtol=1e-5), "tiled mismatch"

    print("KERNEL_OK")
</pallas_src>

<mosaic_0001>
module attributes {stable_mosaic.version = 11 : i64} {
  func.func @_mlp_kernel(%arg0: memref<8x16xf32, #tpu.memory_space<vmem>>, %arg1: memref<16x32xf32, #tpu.memory_space<vmem>>, %arg2: memref<1x32xf32, #tpu.memory_space<vmem>>, %arg3: memref<32x8xf32, #tpu.memory_space<vmem>>, %arg4: memref<1x8xf32, #tpu.memory_space<vmem>>, %arg5: memref<8x8xf32, #tpu.memory_space<vmem>>) attributes {dimension_semantics = [], scalar_prefetch = 0 : i64, scratch_operands = 0 : i64, tpu.core_type = #tpu.core_type<tc>} {
    %c0 = arith.constant 0 : index
    %c0_0 = arith.constant 0 : index
    %0 = vector.load %arg0[%c0, %c0_0] : memref<8x16xf32, #tpu.memory_space<vmem>>, vector<8x16xf32>
    %c0_1 = arith.constant 0 : index
    %c0_2 = arith.constant 0 : index
    %1 = vector.load %arg1[%c0_1, %c0_2] : memref<16x32xf32, #tpu.memory_space<vmem>>, vector<16x32xf32>
    %cst = arith.constant dense<0.000000e+00> : vector<8x32xf32>
    %2 = tpu.matmul %0, %1, %cst {dimension_numbers = #tpu.dot_dimension_numbers<[1], [0], [0], [1], [0, 0, 1, 1], [], []>} : vector<8x16xf32>, vector<16x32xf32>, vector<8x32xf32> -> vector<8x32xf32>
    %c0_3 = arith.constant 0 : index
    %c0_4 = arith.constant 0 : index
    %3 = vector.load %arg2[%c0_3, %c0_4] : memref<1x32xf32, #tpu.memory_space<vmem>>, vector<1x32xf32>
    %4 = vector.broadcast %3 : vector<1x32xf32> to vector<8x32xf32>
    %5 = arith.addf %2, %4 : vector<8x32xf32>
    %cst_5 = arith.constant 0.000000e+00 : f32
    %6 = vector.broadcast %cst_5 : f32 to vector<8x32xf32>
    %7 = arith.maximumf %5, %6 : vector<8x32xf32>
    %c0_6 = arith.constant 0 : index
    %c0_7 = arith.constant 0 : index
    %8 = vector.load %arg3[%c0_6, %c0_7] : memref<32x8xf32, #tpu.memory_space<vmem>>, vector<32x8xf32>
    %cst_8 = arith.constant dense<0.000000e+00> : vector<8x8xf32>
    %9 = tpu.matmul %7, %8, %cst_8 {dimension_numbers = #tpu.dot_dimension_numbers<[1], [0], [0], [1], [0, 0, 1, 1], [], []>} : vector<8x32xf32>, vector<32x8xf32>, vector<8x8xf32> -> vector<8x8xf32>
    %c0_9 = arith.constant 0 : index
    %c0_10 = arith.constant 0 : index
    %10 = vector.load %arg4[%c0_9, %c0_10] : memref<1x8xf32, #tpu.memory_space<vmem>>, vector<1x8xf32>
    %11 = vector.broadcast %10 : vector<1x8xf32> to vector<8x8xf32>
    %12 = arith.addf %9, %11 : vector<8x8xf32>
    %cst_11 = arith.constant 0.000000e+00 : f32
    %13 = vector.broadcast %cst_11 : f32 to vector<8x8xf32>
    %14 = arith.maximumf %12, %13 : vector<8x8xf32>
    %c0_12 = arith.constant 0 : index
    %c0_13 = arith.constant 0 : index
    %15 = vector.load %arg5[%c0_12, %c0_13] : memref<8x8xf32, #tpu.memory_space<vmem>>, vector<8x8xf32>
    tpu.vector_store %arg5[%c0_12, %c0_13], %14 {strides = array<i32>} : memref<8x8xf32, #tpu.memory_space<vmem>>, vector<8x8xf32>,
    return
  }
}

</mosaic_0001>

<llo_original>
// kernel: net_forward.1
$region0: #{net_forward.1}
  #allocation0 [shape = 'u32[]', space=smem, size = 0x4, offset = 0x4, fixed_abs, tag = 'smem constant byte address 0x4 - core index']
  #allocation1 [shape = 'u32[72,128]{1,0:T(1,128)}', space=vmem, size = 0x9000, scoped, tag = 'internal scratch']
  %s0 = inlined_call_operand.vmem [shape: f32[8,16], index: 0, kind: input, shape index: {}]
  %s1 = inlined_call_operand.vmem [shape: f32[16,32], index: 1, kind: input, shape index: {}]
  %s2 = inlined_call_operand.vmem [shape: f32[1,32], index: 2, kind: input, shape index: {}]
  %s3 = inlined_call_operand.vmem [shape: f32[32,8], index: 3, kind: input, shape index: {}]
  %s4 = inlined_call_operand.vmem [shape: f32[1,8], index: 4, kind: input, shape index: {}]
  %s5 = inlined_call_operand.vmem [shape: f32[8,8], index: 5, kind: output, shape index: {}]
  %s6 = sld [smem:[#allocation0]]
  $region30: #{net_forward.1} parent=0
    _
  %s8 = ssub.s32 1, %s6
  %s9 = scalar_select 0, %s8, %s6
  // Predicated region
  $region2: #{net_forward.1} parent=0 // pred_check
    _
  $region3: #{net_forward.1} parent=0 // pred_check_branch
    %11 = sbr.rel (0) target = $region5
  $region4: #{net_forward.1} parent=0 // pred_region
    _
  $region5: #{net_forward.1} parent=0 // pred_fallthru
    _
  // Predicated region
  $region6: #{net_forward.1} parent=0 // pred_check
    _
  $region7: #{net_forward.1} parent=0 // pred_check_branch
    %13 = sbr.rel (0) target = $region9
  $region8: #{net_forward.1} parent=0 // pred_region
    _
  $region9: #{net_forward.1} parent=0 // pred_fallthru
    _
  // Predicated region
  $region10: #{net_forward.1} parent=0 // pred_check
    _
  $region11: #{net_forward.1} parent=0 // pred_check_branch
    %15 = sbr.rel (0) target = $region13
  $region12: #{net_forward.1} parent=0 // pred_region
    _
  $region13: #{net_forward.1} parent=0 // pred_fallthru
    _
  // Predicated region
  $region14: #{net_forward.1} parent=0 // pred_check
    _
  $region15: #{net_forward.1} parent=0 // pred_check_branch
    %17 = sbr.rel (0) target = $region17
  $region16: #{net_forward.1} parent=0 // pred_region
    _
  $region17: #{net_forward.1} parent=0 // pred_fallthru
    _
  // Predicated region
  $region18: #{net_forward.1} parent=0 // pred_check
    _
  $region19: #{net_forward.1} parent=0 // pred_check_branch
    %19 = sbr.rel (0) target = $region21
  $region20: #{net_forward.1} parent=0 // pred_region
    _
  $region21: #{net_forward.1} parent=0 // pred_fallthru
    _
  %v20 = vld [vmem:[%s0] sm:$0xff]
  %v21 = vld [vmem:[%s1] sm:$0xff]
  %v22 = vld [vmem:[%s1 + $0x8] sm:$0xff]
  %v23 = vld [vmem:[%s2] sm:$0x1]
  %v25 = vperm.slane %v23, 0
  %vm27 = vcmask 130048
  %v29 = vsel %vm27, %v20, 0
  %31 = vmatpush.msra.mxu0 0.0
  %32 = vmatpush.msra.mxu0 0.0
  %33 = vmatpush.msra.mxu0 0.0
  %34 = vmatpush.msra.mxu0 0.0
  %35 = vmatpush.msra.mxu0 0.0
  %36 = vmatpush.msra.mxu0 0.0
  %37 = vmatpush.msra.mxu0 0.0
  %38 = vmatpush.msra.mxu0 0.0
  %39 = vmatpush.msra.mxu0 0.0
  %40 = vmatpush.msra.mxu0 0.0
  %41 = vmatpush.msra.mxu0 0.0
  %42 = vmatpush.msra.mxu0 0.0
  %43 = vmatpush.msra.mxu0 0.0
  %44 = vmatpush.msra.mxu0 0.0
  %45 = vmatpush.msra.mxu0 %v22
  %46 = vmatpush.msra.mxu0 %v21
  %47 = vmatmul.f32.gmra.mxu0 %v29
  %v48 = vpop.f32.mrf.mxu0
  %v49 = vadd.f32 %v25, %v48
  %50 = vdwg.mxu0
  %v51 = vmax.f32 %v49, 0.0
  %v52 = vld [vmem:[%s3] sm:$0xff]
  %v53 = vld [vmem:[%s3 + $0x8] sm:$0xff]
  %v54 = vld [vmem:[%s3 + $0x10] sm:$0xff]
  %v55 = vld [vmem:[%s3 + $0x18] sm:$0xff]
  %v56 = vld [vmem:[%s4] sm:$0x1]
  %v58 = vperm.slane %v56, 0
  %vm60 = vcmask 261120
  %v62 = vsel %vm60, %v51, 0
  %64 = vmatpush.msra.mxu0 0.0
  %65 = vmatpush.msra.mxu0 0.0
  %66 = vmatpush.msra.mxu0 0.0
  %67 = vmatpush.msra.mxu0 0.0
  %68 = vmatpush.msra.mxu0 0.0
  %69 = vmatpush.msra.mxu0 0.0
  %70 = vmatpush.msra.mxu0 0.0
  %71 = vmatpush.msra.mxu0 0.0
  %72 = vmatpush.msra.mxu0 0.0
  %73 = vmatpush.msra.mxu0 0.0
  %74 = vmatpush.msra.mxu0 0.0
  %75 = vmatpush.msra.mxu0 0.0
  %76 = vmatpush.msra.mxu0 %v55
  %77 = vmatpush.msra.mxu0 %v54
  %78 = vmatpush.msra.mxu0 %v53
  %79 = vmatpush.msra.mxu0 %v52
  %80 = vmatmul.f32.gmra.mxu0 %v62
  %v81 = vpop.f32.mrf.mxu0
  %v82 = vadd.f32 %v58, %v81
  %83 = vdwg.mxu0
  %v84 = vmax.f32 %v82, 0.0
  %vm85 = vcmask 64512
  %86 = vst.msk [vmem:[%s5] sm:$0xff] %vm85, %v84
  // Predicated region
  $region22: #{net_forward.1} parent=0 // pred_check
    _
  $region23: #{net_forward.1} parent=0 // pred_check_branch
    %88 = sbr.rel (0) target = $region25
  $region24: #{net_forward.1} parent=0 // pred_region
    _
  $region25: #{net_forward.1} parent=0 // pred_fallthru
    _
  // Predicated region
  $region26: #{net_forward.1} parent=0 // pred_check
    _
  $region27: #{net_forward.1} parent=0 // pred_check_branch
    %90 = sbr.rel (0) target = $region29
  $region28: #{net_forward.1} parent=0 // pred_region
    _
  $region29: #{net_forward.1} parent=0 // pred_fallthru
    _

</llo_original>
